<compile_context>
chip_gen: v6e
topology: v6e:2x2x1
jax: 0.10.0
libtpu: 0.0.40
codegen_flags: <defaults>
</compile_context>

<pallas_src>
import jax
import jax.numpy as jnp
from jax.experimental import pallas as pl
from jax.experimental.pallas import tpu as pltpu

LN_EPS = 1e-5  # torch.nn.LayerNorm default


def _round_up(x, m):
    return ((x + m - 1) // m) * m


def _masklm_kernel(x_ref, w1_ref, b1_ref, gamma_ref, beta_ref,
                   w2_ref, b2_ref, o_ref, h_ref):
    """Grid: (row supertiles io, vocab tiles j, inner row tiles ii).

    x_ref:  (RM, num_inputs)      bf16  (changes with io only -> resident)
    w1_ref: (num_inputs, H)       bf16  (constant -> loaded once)
    b1/gamma/beta: (1, H)         f32   (constant)
    w2_ref: (H, tn)               bf16  (changes with j -> streamed once per io)
    b2_ref: (1, tn)               f32
    o_ref:  (tm, tn)              f32   (lane-dense output tile)
    h_ref:  (RM, H) VMEM scratch  bf16  (normalized hidden, resident across j)
    """
    j = pl.program_id(1)
    ii = pl.program_id(2)
    tm = o_ref.shape[0]
    r0 = pl.multiple_of(ii * tm, tm)

    # Linear1 + ReLU + LayerNorm once per inner row tile (on the first vocab
    # tile); result stays resident in VMEM for the rest of the vocab sweep.
    @pl.when(j == 0)
    def _():
        x = x_ref[pl.ds(r0, tm), :]
        h = jnp.dot(x, w1_ref[...],
                    preferred_element_type=jnp.float32) + b1_ref[...]
        h = jnp.maximum(h, 0.0)
        mean = jnp.mean(h, axis=-1, keepdims=True)
        centered = h - mean
        var = jnp.mean(centered * centered, axis=-1, keepdims=True)
        h = (centered * jax.lax.rsqrt(var + LN_EPS)
             * gamma_ref[...] + beta_ref[...])
        h_ref[pl.ds(r0, tm), :] = h.astype(h_ref.dtype)

    # Steady state: one MXU matmul per (row tile, vocab tile).
    o_ref[...] = (jnp.dot(h_ref[pl.ds(r0, tm), :], w2_ref[...],
                          preferred_element_type=jnp.float32)
                  + b2_ref[...]).astype(o_ref.dtype)


def masklm_forward(X, pred_positions, params, *, tm=128, tn=1024,
                   max_rows_resident=1024, compute_dtype=jnp.bfloat16):
    """Pallas implementation of MaskLM.forward.

    X:              (batch, seq_len, num_inputs) float32
    pred_positions: (batch, num_pred) int32
    returns:        (batch, num_pred, vocab_size) float32
    """
    batch, _, num_inputs = X.shape
    num_pred = pred_positions.shape[1]
    w1, b1, gamma, beta, w2, b2 = (params[k] for k in
                                   ("w1", "b1", "gamma", "beta", "w2", "b2"))
    num_hiddens = w1.shape[1]
    vocab_size = w2.shape[1]

    # --- gather glue (equivalent to X[batch_idx, pred_positions]) ---
    masked_X = jnp.take_along_axis(
        X, pred_positions[:, :, None].astype(jnp.int32), axis=1)
    masked_flat = masked_X.reshape(batch * num_pred, num_inputs)

    # --- tile sizes & padding (sublane / lane alignment) ---
    M = batch * num_pred
    tm = min(tm, _round_up(M, 8))                 # rows per output tile (mult of 8)
    tn = min(tn, _round_up(vocab_size, 128))      # vocab cols per tile (mult of 128)
    # rows resident in VMEM per supertile (bounds scratch size)
    RM = min(_round_up(M, tm), max(tm, (max_rows_resident // tm) * tm))
    n_ii = RM // tm
    M_pad = _round_up(M, RM)
    V_pad = _round_up(vocab_size, tn)
    n_io = M_pad // RM
    n_vt = V_pad // tn

    x_p = masked_flat.astype(compute_dtype)
    if M_pad != M:
        x_p = jnp.pad(x_p, ((0, M_pad - M), (0, 0)))
    w1_p = w1.astype(compute_dtype)
    w2_p = w2.astype(compute_dtype)
    b2_p = b2
    if V_pad != vocab_size:
        w2_p = jnp.pad(w2_p, ((0, 0), (0, V_pad - vocab_size)))
        b2_p = jnp.pad(b2_p, ((0, 0), (0, V_pad - vocab_size)))

    grid = (n_io, n_vt, n_ii)
    itemsize = jnp.dtype(compute_dtype).itemsize
    cost = pl.CostEstimate(
        flops=2 * M_pad * num_inputs * num_hiddens
              + 2 * M_pad * num_hiddens * V_pad,
        transcendentals=M_pad,  # rsqrt per row
        bytes_accessed=(x_p.size + w1_p.size) * itemsize
                       + w2_p.size * itemsize * n_io   # w2 streamed per supertile
                       + M_pad * V_pad * 4,            # f32 logits out
    )

    out_flat = pl.pallas_call(
        _masklm_kernel,
        out_shape=jax.ShapeDtypeStruct((M_pad, V_pad), jnp.float32),
        grid_spec=pltpu.PrefetchScalarGridSpec(
            num_scalar_prefetch=0,
            grid=grid,
            in_specs=[
                pl.BlockSpec((RM, num_inputs), lambda io, j, ii: (io, 0)),
                pl.BlockSpec((num_inputs, num_hiddens),
                             lambda io, j, ii: (0, 0)),
                pl.BlockSpec((1, num_hiddens), lambda io, j, ii: (0, 0)),
                pl.BlockSpec((1, num_hiddens), lambda io, j, ii: (0, 0)),
                pl.BlockSpec((1, num_hiddens), lambda io, j, ii: (0, 0)),
                pl.BlockSpec((num_hiddens, tn), lambda io, j, ii: (0, j)),
                pl.BlockSpec((1, tn), lambda io, j, ii: (0, j)),
            ],
            out_specs=pl.BlockSpec(
                (tm, tn), lambda io, j, ii: (io * n_ii + ii, j)),
            scratch_shapes=[pltpu.VMEM((RM, num_hiddens), compute_dtype)],
        ),
        compiler_params=pltpu.CompilerParams(
            dimension_semantics=("parallel", "arbitrary", "arbitrary"),
            vmem_limit_bytes=32 * 1024 * 1024),
        cost_estimate=cost,
    )(x_p, w1_p, b1, gamma, beta, w2_p, b2_p)

    out = out_flat[:M, :vocab_size]
    return out.reshape(batch, num_pred, vocab_size)


def masklm_reference_f32(X, pred_positions, params):
    """Pure-JAX f32 reference (exact module semantics)."""
    batch = X.shape[0]
    num_pred = pred_positions.shape[1]
    masked_X = jnp.take_along_axis(
        X, pred_positions[:, :, None].astype(jnp.int32), axis=1)
    h = masked_X @ params["w1"] + params["b1"]
    h = jnp.maximum(h, 0.0)
    mean = jnp.mean(h, axis=-1, keepdims=True)
    var = jnp.mean((h - mean) ** 2, axis=-1, keepdims=True)
    h = (h - mean) / jnp.sqrt(var + LN_EPS) * params["gamma"] + params["beta"]
    y = h @ params["w2"] + params["b2"]
    return y.reshape(batch, num_pred, -1)


def masklm_reference_matched(X, pred_positions, params,
                             compute_dtype=jnp.bfloat16):
    """Pure-JAX reference with the same precision policy as the kernel
    (bf16 matmul operands, f32 accumulation & LayerNorm)."""
    batch = X.shape[0]
    num_pred = pred_positions.shape[1]
    masked_X = jnp.take_along_axis(
        X, pred_positions[:, :, None].astype(jnp.int32), axis=1)
    x = masked_X.astype(compute_dtype)
    h = jnp.dot(x, params["w1"].astype(compute_dtype),
                preferred_element_type=jnp.float32) + params["b1"]
    h = jnp.maximum(h, 0.0)
    mean = jnp.mean(h, axis=-1, keepdims=True)
    centered = h - mean
    var = jnp.mean(centered * centered, axis=-1, keepdims=True)
    h = centered * jax.lax.rsqrt(var + LN_EPS) * params["gamma"] + params["beta"]
    y = jnp.dot(h.astype(compute_dtype), params["w2"].astype(compute_dtype),
                preferred_element_type=jnp.float32) + params["b2"]
    return y.reshape(batch, num_pred, -1)


def init_params(key, num_inputs, num_hiddens, vocab_size):
    k1, k2, k3, k4 = jax.random.split(key, 4)
    scale1 = 1.0 / jnp.sqrt(num_inputs)
    scale2 = 1.0 / jnp.sqrt(num_hiddens)
    return {
        "w1": jax.random.uniform(k1, (num_inputs, num_hiddens), jnp.float32,
                                 -scale1, scale1),
        "b1": jax.random.uniform(k2, (1, num_hiddens), jnp.float32,
                                 -scale1, scale1),
        "gamma": jnp.ones((1, num_hiddens), jnp.float32),
        "beta": jnp.zeros((1, num_hiddens), jnp.float32),
        "w2": jax.random.uniform(k3, (num_hiddens, vocab_size), jnp.float32,
                                 -scale2, scale2),
        "b2": jax.random.uniform(k4, (1, vocab_size), jnp.float32,
                                 -scale2, scale2),
    }


if __name__ == "__main__":
    # Small synthetic shapes consistent with the module's forward.
    batch, seq_len = 2, 8
    num_inputs, num_hiddens, vocab_size = 32, 32, 128
    num_pred = 4

    key = jax.random.PRNGKey(0)
    kx, kp, kw = jax.random.split(key, 3)

    X = jax.random.normal(kx, (batch, seq_len, num_inputs), jnp.float32)
    pred_positions = jax.random.randint(kp, (batch, num_pred), 0, seq_len,
                                        dtype=jnp.int32)
    params = init_params(kw, num_inputs, num_hiddens, vocab_size)

    out = jax.block_until_ready(masklm_forward(X, pred_positions, params))
    assert out.shape == (batch, num_pred, vocab_size)

    # Tight check vs a precision-matched (bf16 operands, f32 accum) reference.
    ref_matched = masklm_reference_matched(X, pred_positions, params)
    assert jnp.allclose(out, ref_matched, atol=1e-2, rtol=1e-2), \
        "mismatch vs precision-matched reference"

    # Loose check vs the exact f32 module semantics (bf16 weight rounding).
    ref_f32 = masklm_reference_f32(X, pred_positions, params)
    assert jnp.allclose(out, ref_f32, atol=5e-2, rtol=5e-2), \
        "mismatch vs f32 module reference"

    print("KERNEL_OK")
</pallas_src>

<mosaic_0001>
module attributes {stable_mosaic.version = 11 : i64} {
  func.func @_masklm_kernel(%arg0: i32, %arg1: i32, %arg2: i32, %arg3: memref<8x32xbf16, #tpu.memory_space<vmem>>, %arg4: memref<32x32xbf16, #tpu.memory_space<vmem>>, %arg5: memref<1x32xf32, #tpu.memory_space<vmem>>, %arg6: memref<1x32xf32, #tpu.memory_space<vmem>>, %arg7: memref<1x32xf32, #tpu.memory_space<vmem>>, %arg8: memref<32x128xbf16, #tpu.memory_space<vmem>>, %arg9: memref<1x128xf32, #tpu.memory_space<vmem>>, %arg10: memref<8x128xf32, #tpu.memory_space<vmem>>, %arg11: memref<8x32xbf16, #tpu.memory_space<vmem>>) attributes {dimension_semantics = [#tpu.dimension_semantics<parallel>, #tpu.dimension_semantics<arbitrary>, #tpu.dimension_semantics<arbitrary>], iteration_bounds = array<i64: 1, 1, 1>, scalar_prefetch = 0 : i64, scratch_operands = 1 : i64, tpu.core_type = #tpu.core_type<tc>, window_params = [{transform_indices = @transform_0, window_bounds = array<i64: 8, 32>}, {pipeline_mode = #tpu.pipeline_mode<synchronous>, transform_indices = @transform_1, window_bounds = array<i64: 32, 32>}, {pipeline_mode = #tpu.pipeline_mode<synchronous>, transform_indices = @transform_2, window_bounds = array<i64: 1, 32>}, {pipeline_mode = #tpu.pipeline_mode<synchronous>, transform_indices = @transform_3, window_bounds = array<i64: 1, 32>}, {pipeline_mode = #tpu.pipeline_mode<synchronous>, transform_indices = @transform_4, window_bounds = array<i64: 1, 32>}, {transform_indices = @transform_5, window_bounds = array<i64: 32, 128>}, {transform_indices = @transform_6, window_bounds = array<i64: 1, 128>}, {transform_indices = @transform_7, window_bounds = array<i64: 8, 128>}]} {
    %c8_i32 = arith.constant 8 : i32
    %0 = arith.muli %arg2, %c8_i32 : i32
    %1 = tpu.assume_multiple %0, 8 : i32
    %c0_i32 = arith.constant 0 : i32
    %2 = arith.cmpi eq, %arg1, %c0_i32 : i32
    %3 = arith.extui %2 : i1 to i32
    %c0_i32_0 = arith.constant 0 : i32
    %4 = arith.cmpi ne, %3, %c0_i32_0 : i32
    scf.if %4 {
      %13 = arith.index_cast %1 : i32 to index
      %c0_7 = arith.constant 0 : index
      %14 = vector.load %arg3[%13, %c0_7] : memref<8x32xbf16, #tpu.memory_space<vmem>>, vector<8x32xbf16>
      %c0_8 = arith.constant 0 : index
      %c0_9 = arith.constant 0 : index
      %15 = vector.load %arg4[%c0_8, %c0_9] : memref<32x32xbf16, #tpu.memory_space<vmem>>, vector<32x32xbf16>
      %cst_10 = arith.constant dense<0.000000e+00> : vector<8x32xf32>
      %16 = tpu.matmul %14, %15, %cst_10 {dimension_numbers = #tpu.dot_dimension_numbers<[1], [0], [0], [1], [0, 0, 1, 1], [], []>} : vector<8x32xbf16>, vector<32x32xbf16>, vector<8x32xf32> -> vector<8x32xf32>
      %c0_11 = arith.constant 0 : index
      %c0_12 = arith.constant 0 : index
      %17 = vector.load %arg5[%c0_11, %c0_12] : memref<1x32xf32, #tpu.memory_space<vmem>>, vector<1x32xf32>
      %18 = vector.broadcast %17 : vector<1x32xf32> to vector<8x32xf32>
      %19 = arith.addf %16, %18 : vector<8x32xf32>
      %cst_13 = arith.constant 0.000000e+00 : f32
      %20 = vector.broadcast %cst_13 : f32 to vector<8x32xf32>
      %21 = arith.maximumf %19, %20 : vector<8x32xf32>
      %cst_14 = arith.constant dense<0.000000e+00> : vector<8xf32>
      %22 = vector.multi_reduction <add>, %21, %cst_14 [1] : vector<8x32xf32> to vector<8xf32>
      %23 = vector.shape_cast %22 : vector<8xf32> to vector<8x1xf32>
      %cst_15 = arith.constant 3.200000e+01 : f32
      %24 = vector.broadcast %cst_15 : f32 to vector<8x1xf32>
      %25 = arith.divf %23, %24 : vector<8x1xf32>
      %26 = vector.broadcast %25 : vector<8x1xf32> to vector<8x32xf32>
      %27 = arith.subf %21, %26 : vector<8x32xf32>
      %28 = arith.mulf %27, %27 : vector<8x32xf32>
      %cst_16 = arith.constant dense<0.000000e+00> : vector<8xf32>
      %29 = vector.multi_reduction <add>, %28, %cst_16 [1] : vector<8x32xf32> to vector<8xf32>
      %30 = vector.shape_cast %29 : vector<8xf32> to vector<8x1xf32>
      %cst_17 = arith.constant 3.200000e+01 : f32
      %31 = vector.broadcast %cst_17 : f32 to vector<8x1xf32>
      %32 = arith.divf %30, %31 : vector<8x1xf32>
      %cst_18 = arith.constant 9.99999974E-6 : f32
      %33 = vector.broadcast %cst_18 : f32 to vector<8x1xf32>
      %34 = arith.addf %32, %33 : vector<8x1xf32>
      %35 = math.rsqrt %34 : vector<8x1xf32>
      %36 = vector.broadcast %35 : vector<8x1xf32> to vector<8x32xf32>
      %37 = arith.mulf %27, %36 : vector<8x32xf32>
      %c0_19 = arith.constant 0 : index
      %c0_20 = arith.constant 0 : index
      %38 = vector.load %arg6[%c0_19, %c0_20] : memref<1x32xf32, #tpu.memory_space<vmem>>, vector<1x32xf32>
      %39 = vector.broadcast %38 : vector<1x32xf32> to vector<8x32xf32>
      %40 = arith.mulf %37, %39 : vector<8x32xf32>
      %c0_21 = arith.constant 0 : index
      %c0_22 = arith.constant 0 : index
      %41 = vector.load %arg7[%c0_21, %c0_22] : memref<1x32xf32, #tpu.memory_space<vmem>>, vector<1x32xf32>
      %42 = vector.broadcast %41 : vector<1x32xf32> to vector<8x32xf32>
      %43 = arith.addf %40, %42 : vector<8x32xf32>
      %44 = arith.truncf %43 : vector<8x32xf32> to vector<8x32xbf16>
      %45 = arith.index_cast %1 : i32 to index
      %c0_23 = arith.constant 0 : index
      %46 = vector.load %arg11[%45, %c0_23] : memref<8x32xbf16, #tpu.memory_space<vmem>>, vector<8x32xbf16>
      tpu.vector_store %arg11[%45, %c0_23], %44 {strides = array<i32>} : memref<8x32xbf16, #tpu.memory_space<vmem>>, vector<8x32xbf16>,
    } else {
    }
    %5 = arith.index_cast %1 : i32 to index
    %c0 = arith.constant 0 : index
    %6 = vector.load %arg11[%5, %c0] : memref<8x32xbf16, #tpu.memory_space<vmem>>, vector<8x32xbf16>
    %c0_1 = arith.constant 0 : index
    %c0_2 = arith.constant 0 : index
    %7 = vector.load %arg8[%c0_1, %c0_2] : memref<32x128xbf16, #tpu.memory_space<vmem>>, vector<32x128xbf16>
    %cst = arith.constant dense<0.000000e+00> : vector<8x128xf32>
    %8 = tpu.matmul %6, %7, %cst {dimension_numbers = #tpu.dot_dimension_numbers<[1], [0], [0], [1], [0, 0, 1, 1], [], []>} : vector<8x32xbf16>, vector<32x128xbf16>, vector<8x128xf32> -> vector<8x128xf32>
    %c0_3 = arith.constant 0 : index
    %c0_4 = arith.constant 0 : index
    %9 = vector.load %arg9[%c0_3, %c0_4] : memref<1x128xf32, #tpu.memory_space<vmem>>, vector<1x128xf32>
    %10 = vector.broadcast %9 : vector<1x128xf32> to vector<8x128xf32>
    %11 = arith.addf %8, %10 : vector<8x128xf32>
    %c0_5 = arith.constant 0 : index
    %c0_6 = arith.constant 0 : index
    %12 = vector.load %arg10[%c0_5, %c0_6] : memref<8x128xf32, #tpu.memory_space<vmem>>, vector<8x128xf32>
    tpu.vector_store %arg10[%c0_5, %c0_6], %11 {strides = array<i32>} : memref<8x128xf32, #tpu.memory_space<vmem>>, vector<8x128xf32>,
    return
  }
  func.func @transform_0(%arg0: i32, %arg1: i32, %arg2: i32) -> (i32, i32) {
    %c0_i32 = arith.constant 0 : i32
    %c0_i32_0 = arith.constant 0 : i32
    return %arg0, %c0_i32 : i32, i32
  }
  func.func @transform_1(%arg0: i32, %arg1: i32, %arg2: i32) -> (i32, i32) {
    %c0_i32 = arith.constant 0 : i32
    %c0_i32_0 = arith.constant 0 : i32
    %c0_i32_1 = arith.constant 0 : i32
    return %c0_i32, %c0_i32_0 : i32, i32
  }
  func.func @transform_2(%arg0: i32, %arg1: i32, %arg2: i32) -> (i32, i32) {
    %c0_i32 = arith.constant 0 : i32
    %c0_i32_0 = arith.constant 0 : i32
    %c0_i32_1 = arith.constant 0 : i32
    return %c0_i32, %c0_i32_0 : i32, i32
  }
  func.func @transform_3(%arg0: i32, %arg1: i32, %arg2: i32) -> (i32, i32) {
    %c0_i32 = arith.constant 0 : i32
    %c0_i32_0 = arith.constant 0 : i32
    %c0_i32_1 = arith.constant 0 : i32
    return %c0_i32, %c0_i32_0 : i32, i32
  }
  func.func @transform_4(%arg0: i32, %arg1: i32, %arg2: i32) -> (i32, i32) {
    %c0_i32 = arith.constant 0 : i32
    %c0_i32_0 = arith.constant 0 : i32
    %c0_i32_1 = arith.constant 0 : i32
    return %c0_i32, %c0_i32_0 : i32, i32
  }
  func.func @transform_5(%arg0: i32, %arg1: i32, %arg2: i32) -> (i32, i32) {
    %c0_i32 = arith.constant 0 : i32
    %c0_i32_0 = arith.constant 0 : i32
    return %c0_i32, %arg1 : i32, i32
  }
  func.func @transform_6(%arg0: i32, %arg1: i32, %arg2: i32) -> (i32, i32) {
    %c0_i32 = arith.constant 0 : i32
    %c0_i32_0 = arith.constant 0 : i32
    return %c0_i32, %arg1 : i32, i32
  }
  func.func @transform_7(%arg0: i32, %arg1: i32, %arg2: i32) -> (i32, i32) {
    %c1_i32 = arith.constant 1 : i32
    %0 = arith.muli %arg0, %c1_i32 : i32
    %1 = arith.addi %0, %arg2 : i32
    %c0_i32 = arith.constant 0 : i32
    return %1, %arg1 : i32, i32
  }
}

</mosaic_0001>

<llo_original>
// kernel: tpu_custom_call.1
$region0: #{tpu_custom_call.1}
  #allocation0 [shape = 'u32[]', space=smem, size = 0x4, offset = 0x4, fixed_abs, tag = 'smem constant byte address 0x4 - core index']
  #allocation1 [shape = 'u32[144,128]{1,0:T(1,128)}', space=vmem, size = 0x12000, scoped, tag = 'internal scratch']
  #allocation2 [shape = 'bf16[8,32]{1,0:T(8,128)(2,1)}', space=vmem, size = 0x800, scoped, tag = 'scratch operand']
  %s0 = inlined_call_operand.hbm [shape: bf16[8,32], index: 0, kind: input, shape index: {}]
  %s1 = inlined_call_operand.hbm [shape: bf16[32,32], index: 1, kind: input, shape index: {}]
  %s2 = inlined_call_operand.vmem [shape: f32[1,32], index: 2, kind: input, shape index: {}]
  %s3 = inlined_call_operand.vmem [shape: f32[1,32], index: 3, kind: input, shape index: {}]
  %s4 = inlined_call_operand.vmem [shape: f32[1,32], index: 4, kind: input, shape index: {}]
  %s5 = inlined_call_operand.hbm [shape: bf16[32,128], index: 5, kind: input, shape index: {}]
  %s6 = inlined_call_operand.vmem [shape: f32[1,128], index: 6, kind: input, shape index: {}]
  %s7 = inlined_call_operand.hbm [shape: f32[8,128], index: 7, kind: output, shape index: {}]
  %s8 = sld [smem:[#allocation0]]
  $region54: #{tpu_custom_call.1} parent=0
    _
  %s10 = ssub.s32 1, %s8
  %s11 = scalar_select 0, %s10, %s8
  $region1: #{tpu_custom_call.1} parent=0
    #allocation3 [shape = 'u8[2048]{0}', space=vmem, size = 0x800, scoped, tag = 'input window, operand 0, single buffered']
    #allocation4 [shape = 's32[1]{0}', space=sflag, size = 0x4, scoped, tag = 'scoped memory for tpu_custom_call.1']
    #allocation5 [shape = 's32[1]{0}', space=sflag, size = 0x4, scoped, tag = 'scoped memory for tpu_custom_call.1']
    #allocation6 [shape = 'u8[8192]{0}', space=vmem, size = 0x2000, scoped, tag = 'input window, operand 1, single buffered']
    #allocation7 [shape = 's32[1]{0}', space=sflag, size = 0x4, scoped, tag = 'scoped memory for tpu_custom_call.1']
    #allocation8 [shape = 'u8[8192]{0}', space=vmem, size = 0x2000, scoped, tag = 'input window, operand 5, single buffered']
    #allocation9 [shape = 'u8[4096]{0}', space=vmem, size = 0x1000, scoped, tag = 'output window, operand 0, single buffered']
    %12 = vsyncpa [#allocation4], 0
    %13 = vsyncpa [#allocation7], 0
    %14 = vsyncpa [#allocation5], 0
    // Predicated region
    $region2: #{tpu_custom_call.1} parent=1 // pred_check
      _
    $region3: #{tpu_custom_call.1} parent=1 // pred_check_branch
      %16 = sbr.rel (0) target = $region5
    $region4: #{tpu_custom_call.1} parent=1 // pred_region
      %s18 = ssub.s32 64, 64
      %19 = vsyncadd [#allocation4], %s18
      %s21 = sshll.u32 [#allocation3], 4
      %s22 = int_to_ptr.vmem [resolvable:$true] %s21
      %24 = dma.hbm_to_vmem [thread:$0]  %s0, 64, %s22, [#allocation4]
    $region5: #{tpu_custom_call.1} parent=1 // pred_fallthru
      _
    // Predicated region
    $region6: #{tpu_custom_call.1} parent=1 // pred_check
      _
    $region7: #{tpu_custom_call.1} parent=1 // pred_check_branch
      %26 = sbr.rel (0) target = $region9
    $region8: #{tpu_custom_call.1} parent=1 // pred_region
      %s28 = ssub.s32 256, 256
      %29 = vsyncadd [#allocation7], %s28
      %s30 = sshll.u32 [#allocation6], 4
      %s31 = int_to_ptr.vmem [resolvable:$true] %s30
      %36 = dma.hbm_to_vmem [thread:$0]  %s1, 256, %s31, [#allocation7], 64, 64, 4
    $region9: #{tpu_custom_call.1} parent=1 // pred_fallthru
      _
    // Predicated region
    $region10: #{tpu_custom_call.1} parent=1 // pred_check
      _
    $region11: #{tpu_custom_call.1} parent=1 // pred_check_branch
      %38 = sbr.rel (0) target = $region13
    $region12: #{tpu_custom_call.1} parent=1 // pred_region
      _
    $region13: #{tpu_custom_call.1} parent=1 // pred_fallthru
      _
    // Predicated region
    $region14: #{tpu_custom_call.1} parent=1 // pred_check
      _
    $region15: #{tpu_custom_call.1} parent=1 // pred_check_branch
      %40 = sbr.rel (0) target = $region17
    $region16: #{tpu_custom_call.1} parent=1 // pred_region
      _
    $region17: #{tpu_custom_call.1} parent=1 // pred_fallthru
      _
    // Predicated region
    $region18: #{tpu_custom_call.1} parent=1 // pred_check
      _
    $region19: #{tpu_custom_call.1} parent=1 // pred_check_branch
      %42 = sbr.rel (0) target = $region21
    $region20: #{tpu_custom_call.1} parent=1 // pred_region
      _
    $region21: #{tpu_custom_call.1} parent=1 // pred_fallthru
      _
    // Predicated region
    $region22: #{tpu_custom_call.1} parent=1 // pred_check
      _
    $region23: #{tpu_custom_call.1} parent=1 // pred_check_branch
      %44 = sbr.rel (0) target = $region25
    $region24: #{tpu_custom_call.1} parent=1 // pred_region
      %s46 = ssub.s32 256, 256
      %47 = vsyncadd [#allocation7], %s46
      %s48 = sshll.u32 [#allocation8], 4
      %s49 = int_to_ptr.vmem [resolvable:$true] %s48
      %54 = dma.hbm_to_vmem [thread:$0]  %s5, 256, %s49, [#allocation7], 64, 64, 4
    $region25: #{tpu_custom_call.1} parent=1 // pred_fallthru
      _
    // Predicated region
    $region26: #{tpu_custom_call.1} parent=1 // pred_check
      _
    $region27: #{tpu_custom_call.1} parent=1 // pred_check_branch
      %56 = sbr.rel (0) target = $region29
    $region28: #{tpu_custom_call.1} parent=1 // pred_region
      _
    $region29: #{tpu_custom_call.1} parent=1 // pred_fallthru
      _
    // Predicated region
    $region30: #{tpu_custom_call.1} parent=1 // pred_check
      _
    $region31: #{tpu_custom_call.1} parent=1 // pred_check_branch
      %58 = sbr.rel (0) target = $region33
    $region32: #{tpu_custom_call.1} parent=1 // pred_region
      %59 = dma.done [#allocation4], 64
    $region33: #{tpu_custom_call.1} parent=1 // pred_fallthru
      _
    // Predicated region
    $region34: #{tpu_custom_call.1} parent=1 // pred_check
      _
    $region35: #{tpu_custom_call.1} parent=1 // pred_check_branch
      %61 = sbr.rel (0) target = $region37
    $region36: #{tpu_custom_call.1} parent=1 // pred_region
      %62 = dma.done [#allocation7], 256
    $region37: #{tpu_custom_call.1} parent=1 // pred_fallthru
      _
    // Predicated region
    $region38: #{tpu_custom_call.1} parent=1 // pred_check
      _
    $region39: #{tpu_custom_call.1} parent=1 // pred_check_branch
      %64 = sbr.rel (0) target = $region41
    $region40: #{tpu_custom_call.1} parent=1 // pred_region
      %65 = dma.done [#allocation7], 256
    $region41: #{tpu_custom_call.1} parent=1 // pred_fallthru
      _
    %s66 = sadd.s32 0, 0
    %s68 = smul.u32 0, 8
    %p69 = scmp.eq.s32.totalorder 0, 0
    // Predicated region
    $region42: #{tpu_custom_call.1} parent=1 // pred_check
      %p70 = pneg %p69
    $region43: #{tpu_custom_call.1} parent=1 // pred_check_branch
      %72 = sbr.rel (%p70) target = $region45
    $region44: #{tpu_custom_call.1} parent=1 // pred_region
      %s73 = sshra.s32 %s68, 3
      %s74 = sand.u32 %s68, 7
      %s75 = smul.addr %s73, 4
      %s76 = scalar_lea.vmem [#allocation3], %s75
      %v77 = vld [vmem:[%s76] sm:$0xf]
      %v78 = vld [vmem:[#allocation6] sm:$0xf]
      %v79 = vld [vmem:[#allocation6 + $0x4] sm:$0xf]
      %v80 = vld [vmem:[#allocation6 + $0x8] sm:$0xf]
      %v81 = vld [vmem:[#allocation6 + $0xc] sm:$0xf]
      %v82 = vld [vmem:[%s2] sm:$0x1]
      %v84 = vlaneseq
      %v85 = vshrl.u32 %v84, 7
      %v86 = vsub.s32 0, %v85
      %v87 = vrot.slane %v82, %v86
      %v93 = vunpack.c.l.b16 %v78
      %v94 = vunpack.c.l.b16 %v79
      %v95 = vunpack.c.l.b16 %v80
      %v96 = vunpack.c.l.b16 %v81
      %v97 = vpack.c.b16 %v94, %v93
      %v98 = vpack.c.b16 %v96, %v95
      %vm101 = vcmask 261120
      %v103 = vsel %vm101, %v77, 0
      %105 = vmatprep.subr.bf16.mxu0 0
      %106 = vmatpush1.bf16.msra.mxu0 0
      %107 = vmatprep.subr.bf16.mxu0 0
      %108 = vmatpush1.bf16.msra.mxu0 0
      %109 = vmatprep.subr.bf16.mxu0 0
      %110 = vmatpush1.bf16.msra.mxu0 0
      %111 = vmatprep.subr.bf16.mxu0 0
      %112 = vmatpush1.bf16.msra.mxu0 0
      %113 = vmatprep.subr.bf16.mxu0 0
      %114 = vmatpush1.bf16.msra.mxu0 0
      %115 = vmatprep.subr.bf16.mxu0 0
      %116 = vmatpush1.bf16.msra.mxu0 0
      %117 = vmatprep.subr.bf16.mxu0 0
      %118 = vmatpush1.bf16.msra.mxu0 %v98
      %119 = vmatprep.subr.bf16.mxu0 0
      %120 = vmatpush1.bf16.msra.mxu0 %v97
      %121 = vmatprep.subr.bf16.mxu0 0
      %122 = vmatpush2.bf16.msra.mxu0 0
      %123 = vmatprep.subr.bf16.mxu0 0
      %124 = vmatpush2.bf16.msra.mxu0 0
      %125 = vmatprep.subr.bf16.mxu0 0
      %126 = vmatpush2.bf16.msra.mxu0 0
      %127 = vmatprep.subr.bf16.mxu0 0
      %128 = vmatpush2.bf16.msra.mxu0 0
      %129 = vmatprep.subr.bf16.mxu0 0
      %130 = vmatpush2.bf16.msra.mxu0 0
      %131 = vmatprep.subr.bf16.mxu0 0
      %132 = vmatpush2.bf16.msra.mxu0 0
      %133 = vmatprep.subr.bf16.mxu0 0
      %134 = vmatpush2.bf16.msra.mxu0 0
      %135 = vmatprep.subr.bf16.mxu0 0
      %136 = vmatpush2.bf16.msra.mxu0 0
      %137 = vmatprep.mubr.bf16.mxu0 0
      %138 = vmatmul.mubr.bf16.gmra.mxu0 %v103
      %v139 = vpop.f32.mrf.mxu0
      %v140 = vadd.f32 %v87, %v139
      %v141 = vpop.f32.mrf.mxu0
      %v142 = vpop.f32.mrf.mxu0
      %v143 = vpop.f32.mrf.mxu0
      %144 = vdwg.mxu0
      %v145 = vmax.f32 %v140, 0.0
      %v146 = vsel %vm101, %v145, 0.0
      %147 = vadd.xlane.f32.xlu0 %v146
      %v148 = vpop.xlane.xlu0 %147
      %v149 = vrcp.pop 32.0
      %v150 = vmul.f32 %v148, %v149
      %v151 = vsub.f32 %v145, %v150
      %v152 = vmul.f32 %v151, %v151
      %v153 = vsel %vm101, %v152, 0.0
      %154 = vadd.xlane.f32.xlu0 %v153
      %v155 = vpop.xlane.xlu0 %154
      %v156 = vmul.f32 %v155, %v149
      %v157 = vadd.f32 %v156, 1e-05
      %v158 = vrsqrt.pop %v157
      %v159 = vmul.f32 %v151, %v158
      %v160 = vld [vmem:[%s3] sm:$0x1]
      %v162 = vlaneseq
      %v163 = vshrl.u32 %v162, 7
      %v164 = vsub.s32 0, %v163
      %v165 = vrot.slane %v160, %v164
      %v167 = vmul.f32 %v159, %v165
      %v168 = vld [vmem:[%s4] sm:$0x1]
      %v170 = vlaneseq
      %v171 = vshrl.u32 %v170, 7
      %v172 = vsub.s32 0, %v171
      %v173 = vrot.slane %v168, %v172
      %v175 = vadd.f32 %v167, %v173
      %v176 = vpack.c.bf16 %v175, %v175
      %s177 = smul.addr %s73, 4
      %s178 = scalar_lea.vmem [#allocation2], %s177
      %vm179 = vcmask 257024
      %180 = vst.msk [vmem:[%s178] sm:$0xf] %vm179, %v176
    $region45: #{tpu_custom_call.1} parent=1 // pred_fallthru
      _
    %s181 = sshra.s32 %s68, 3
    %s182 = sand.u32 %s68, 7
    %s183 = smul.addr %s181, 4
    %s184 = scalar_lea.vmem [#allocation2], %s183
    %v185 = vld [vmem:[%s184] sm:$0xf]
    %v186 = vld [vmem:[#allocation8] sm:$0xf]
    %v187 = vld [vmem:[#allocation8 + $0x4] sm:$0xf]
    %v188 = vld [vmem:[#allocation8 + $0x8] sm:$0xf]
    %v189 = vld [vmem:[#allocation8 + $0xc] sm:$0xf]
    %v190 = vld [vmem:[%s6] sm:$0x1]
    %v192 = vlaneseq
    %v193 = vshrl.u32 %v192, 7
    %v194 = vsub.s32 0, %v193
    %v195 = vrot.slane %v190, %v194
    %v201 = vunpack.c.l.b16 %v186
    %v202 = vunpack.c.l.b16 %v187
    %v203 = vunpack.c.l.b16 %v188
    %v204 = vunpack.c.l.b16 %v189
    %v205 = vpack.c.b16 %v202, %v201
    %v206 = vpack.c.b16 %v204, %v203
    %vm209 = vcmask 261120
    %v211 = vsel %vm209, %v185, 0
    %213 = vmatprep.subr.bf16.mxu0 0
    %214 = vmatpush1.bf16.msra.mxu0 0
    %215 = vmatprep.subr.bf16.mxu0 0
    %216 = vmatpush1.bf16.msra.mxu0 0
    %217 = vmatprep.subr.bf16.mxu0 0
    %218 = vmatpush1.bf16.msra.mxu0 0
    %219 = vmatprep.subr.bf16.mxu0 0
    %220 = vmatpush1.bf16.msra.mxu0 0
    %221 = vmatprep.subr.bf16.mxu0 0
    %222 = vmatpush1.bf16.msra.mxu0 0
    %223 = vmatprep.subr.bf16.mxu0 0
    %224 = vmatpush1.bf16.msra.mxu0 0
    %225 = vmatprep.subr.bf16.mxu0 0
    %226 = vmatpush1.bf16.msra.mxu0 %v206
    %227 = vmatprep.subr.bf16.mxu0 0
    %228 = vmatpush1.bf16.msra.mxu0 %v205
    %229 = vmatprep.subr.bf16.mxu0 0
    %230 = vmatpush2.bf16.msra.mxu0 0
    %231 = vmatprep.subr.bf16.mxu0 0
    %232 = vmatpush2.bf16.msra.mxu0 0
    %233 = vmatprep.subr.bf16.mxu0 0
    %234 = vmatpush2.bf16.msra.mxu0 0
    %235 = vmatprep.subr.bf16.mxu0 0
    %236 = vmatpush2.bf16.msra.mxu0 0
    %237 = vmatprep.subr.bf16.mxu0 0
    %238 = vmatpush2.bf16.msra.mxu0 0
    %239 = vmatprep.subr.bf16.mxu0 0
    %240 = vmatpush2.bf16.msra.mxu0 0
    %241 = vmatprep.subr.bf16.mxu0 0
    %242 = vmatpush2.bf16.msra.mxu0 0
    %243 = vmatprep.subr.bf16.mxu0 0
    %244 = vmatpush2.bf16.msra.mxu0 0
    %245 = vmatprep.mubr.bf16.mxu0 0
    %246 = vmatmul.mubr.bf16.gmra.mxu0 %v211
    %v247 = vpop.f32.mrf.mxu0
    %v248 = vadd.f32 %v195, %v247
    %v249 = vpop.f32.mrf.mxu0
    %v250 = vpop.f32.mrf.mxu0
    %v251 = vpop.f32.mrf.mxu0
    %252 = vdwg.mxu0
    %253 = vst [vmem:[#allocation9] sm:$0xff] %v248
    // Predicated region
    $region46: #{tpu_custom_call.1} parent=1 // pred_check
      _
    $region47: #{tpu_custom_call.1} parent=1 // pred_check_branch
      %255 = sbr.rel (0) target = $region49
    $region48: #{tpu_custom_call.1} parent=1 // pred_region
      %s256 = sadd.s32 0, 0
      %s258 = ssub.s32 128, 128
      %259 = vsyncadd [#allocation5], %s258
      %s260 = smul.addr %s256, 128
      %s261 = scalar_lea.hbm %s7, %s260
      %s263 = sshll.u32 [#allocation9], 4
      %s264 = int_to_ptr.vmem [resolvable:$true] %s263
      %266 = dma.vmem_to_hbm [thread:$0]  %s264, 128, %s261, [#allocation5]
    $region49: #{tpu_custom_call.1} parent=1 // pred_fallthru
      _
    // Predicated region
    $region50: #{tpu_custom_call.1} parent=1 // pred_check
      _
    $region51: #{tpu_custom_call.1} parent=1 // pred_check_branch
      %268 = sbr.rel (0) target = $region53
    $region52: #{tpu_custom_call.1} parent=1 // pred_region
      %269 = dma.done [#allocation5], 128
    $region53: #{tpu_custom_call.1} parent=1 // pred_fallthru
      _
    %270 = vsyncpa [#allocation4], 1
    %271 = vsyncpa [#allocation7], 1
    %272 = vsyncpa [#allocation5], 1

</llo_original>
